<compile_context>
chip_gen: v7x
topology: tpu7x:2x2x1
jax: 0.10.0
libtpu: 0.0.40
codegen_flags: <defaults>
</compile_context>

<pallas_src>
import math
from functools import partial

import jax
import jax.numpy as jnp
from jax.experimental import pallas as pl
from jax.experimental.pallas import tpu as pltpu


def _sine_kernel(vals_ref, triu_ref, out_ref, *, n_sub, sine_amp):
    """One time-chunk: blocked cumulative phase along lanes -> sin(2*pi*x).

    vals_ref : (R, TC)  per-sample phase increments; the chunk's starting
               phase has already been folded into lane 0 by the wrapper.
    triu_ref : (128, 128) upper-triangular ones (inclusive-cumsum operand).
    out_ref  : (R, TC)  sin(2*pi*phase) * sine_amp.
    """
    f32 = jnp.float32
    two_pi = f32(2.0 * math.pi)
    triu = triu_ref[...]                              # (128, 128)

    carry = None                                      # (R, 1) running phase
    for s in range(n_sub):                            # static unroll, small
        blk = vals_ref[:, s * 128:(s + 1) * 128]      # (R, 128)
        # inclusive cumsum along the lane axis via a small f32 matmul
        ph = jnp.dot(blk, triu, preferred_element_type=f32,
                     precision=jax.lax.Precision.HIGHEST)
        if carry is not None:
            ph = ph + carry
        # carry only the fractional part: sin(2*pi*x) is mod-1 invariant
        carry = ph[:, 127:128]
        carry = carry - jnp.floor(carry)
        frac = ph - jnp.floor(ph)
        out_ref[:, s * 128:(s + 1) * 128] = jnp.sin(frac * two_pi) * sine_amp


def _round_up(x, m):
    return ((x + m - 1) // m) * m


class SineGenPallas:
    """Pallas TPU implementation of the NSF SineGen forward pass."""

    def __init__(self, samp_rate, harmonic_num=0, sine_amp=0.1,
                 noise_std=0.003, voiced_threshold=0.0, chunk=1024):
        self.sample_rate = samp_rate
        self.harmonic_num = harmonic_num
        self.dim = harmonic_num + 1
        self.sine_amp = sine_amp
        self.noise_std = noise_std
        self.voiced_threshold = voiced_threshold
        self.chunk = max(128, _round_up(chunk, 128))

    def __call__(self, f0, upp, key):
        f32 = jnp.float32
        B, L = f0.shape
        T = L * upp
        dim = self.dim
        rows = B * dim

        # chunking: time padded to a 128-aligned chunk multiple, rows to 8
        TC = min(self.chunk, _round_up(T, 128))
        Tp = _round_up(T, TC)
        NC = Tp // TC
        R = max(8, _round_up(rows, 8))

        k1, k2 = jax.random.split(key)
        rand_ini = jax.random.uniform(k1, (B, dim), dtype=f32)
        rand_ini = rand_ini.at[:, 0].set(0.0)          # torch: rand_ini[:,0]=0
        z = jax.random.normal(k2, (B, T, dim), dtype=f32)

        f0 = f0.astype(f32)
        harm = jnp.arange(1, dim + 1, dtype=f32)

        # frame-level phase increments (O(B*dim*L), cheap)
        rad = (f0[:, None, :] * harm[None, :, None]
               / float(self.sample_rate)) % 1.0        # (B, dim, L)
        rad = rad.at[:, :, 0].add(rand_ini)            # random initial phase
        rad_rows = rad.reshape(rows, L)

        # nearest-neighbour upsample to sample rate, fold (B, dim) -> rows
        vals = jnp.repeat(rad_rows, upp, axis=1)       # (rows, T)
        vals = jnp.pad(vals, ((0, R - rows), (0, Tp - T)))   # (R, Tp)

        # per-chunk starting phase (mod 1), folded into each chunk's lane 0
        # so every chunk is independent (no carried scratch, parallel grid).
        vals_c = vals.reshape(R, NC, TC)
        csum = jnp.sum(vals_c, axis=2)                 # (R, NC)
        csum = csum - jnp.floor(csum)
        start = jnp.concatenate(
            [jnp.zeros((R, 1), f32), jnp.cumsum(csum[:, :-1], axis=1)], axis=1)
        start = start - jnp.floor(start)               # (R, NC)
        vals_c = vals_c.at[:, :, 0].add(start)
        vals = vals_c.reshape(R, Tp)

        triu = jnp.triu(jnp.ones((128, 128), dtype=f32))

        kernel = partial(_sine_kernel, n_sub=TC // 128, sine_amp=self.sine_amp)

        sine_rows = pl.pallas_call(
            kernel,
            out_shape=jax.ShapeDtypeStruct((R, Tp), f32),
            grid=(NC,),
            in_specs=[
                pl.BlockSpec((R, TC), lambda c: (0, c)),      # phase increments
                pl.BlockSpec((128, 128), lambda c: (0, 0)),   # triu (invariant)
            ],
            out_specs=pl.BlockSpec((R, TC), lambda c: (0, c)),
            compiler_params=pltpu.CompilerParams(
                dimension_semantics=("parallel",)),
        )(vals, triu)

        # raw sine back to (B, T, dim)
        sine = sine_rows[:rows, :T].reshape(B, dim, T)
        sine = jnp.transpose(sine, (0, 2, 1))          # (B, T, dim)

        # uv / noise / mix: pure elementwise, done once in the output layout
        f0_up = jnp.repeat(f0, upp, axis=1)            # (B, T)
        uv = (f0_up > self.voiced_threshold).astype(f32)[:, :, None]  # (B,T,1)
        noise_amp = uv * self.noise_std + (1.0 - uv) * (self.sine_amp / 3.0)
        noise = noise_amp * z                          # (B, T, dim)
        sine_waves = sine * uv + noise

        return sine_waves, uv, noise, rand_ini, z


def sinegen_reference(f0, upp, rand_ini, z, *, sample_rate, harmonic_num,
                      sine_amp, noise_std, voiced_threshold):
    """Pure-JAX re-implementation of the torch forward (same RNG inputs)."""
    B, L = f0.shape
    dim = harmonic_num + 1
    T = L * upp
    f0_3 = f0[:, :, None].astype(jnp.float32)
    harm = jnp.arange(1, dim + 1, dtype=jnp.float32)
    f0_buf = f0_3 * harm[None, None, :]
    rad = (f0_buf / sample_rate) % 1.0
    rad = rad.at[:, 0, :].add(rand_ini)
    tmp = jnp.cumsum(rad, axis=1) * upp
    src = jnp.arange(T, dtype=jnp.float32) * ((L - 1) / max(T - 1, 1))
    idx0 = jnp.floor(src).astype(jnp.int32)
    frac = (src - idx0.astype(jnp.float32))[None, :, None]
    idx1 = jnp.minimum(idx0 + 1, L - 1)
    tmp_up = tmp[:, idx0, :] * (1.0 - frac) + tmp[:, idx1, :] * frac
    nn_idx = jnp.arange(T) // upp
    rad_up = rad[:, nn_idx, :]
    tmp_up = tmp_up % 1.0
    wrapped = (tmp_up[:, 1:, :] - tmp_up[:, :-1, :]) < 0
    cshift = jnp.concatenate(
        [jnp.zeros((B, 1, dim), jnp.float32),
         jnp.where(wrapped, -1.0, 0.0)], axis=1)
    sine = jnp.sin(jnp.cumsum(rad_up + cshift, axis=1) * 2.0 * jnp.pi) * sine_amp
    uv = (f0_3 > voiced_threshold).astype(jnp.float32)
    uv = uv[:, nn_idx, :]
    noise_amp = uv * noise_std + (1.0 - uv) * sine_amp / 3.0
    noise = noise_amp * z
    sine = sine * uv + noise
    return sine, uv, noise


if __name__ == "__main__":
    # TODO(synk): the surrounding E2E model (DeepUnet convs + BiGRU head) is a
    # separate graph; this kernel covers the SineGen harmonic-source forward.
    B, L, upp = 2, 32, 8                 # T = 256 -> two 128-sample chunks
    samp_rate, harmonic_num = 16000, 4   # dim = 5

    key = jax.random.PRNGKey(0)
    kf0, krng = jax.random.split(key)
    f0 = jax.random.uniform(kf0, (B, L), minval=80.0, maxval=400.0,
                            dtype=jnp.float32)
    f0 = f0.at[:, :4].set(0.0)           # a few unvoiced frames

    gen = SineGenPallas(samp_rate, harmonic_num=harmonic_num, chunk=128)
    sine, uv, noise, rand_ini, z = gen(f0, upp, krng)
    jax.block_until_ready((sine, uv, noise))

    # sanity check against a pure-JAX reference (same random inputs)
    sine_r, uv_r, noise_r = sinegen_reference(
        f0, upp, rand_ini, z, sample_rate=samp_rate,
        harmonic_num=harmonic_num, sine_amp=0.1, noise_std=0.003,
        voiced_threshold=0.0)

    assert sine.shape == (B, L * upp, harmonic_num + 1)
    assert uv.shape == (B, L * upp, 1)
    assert noise.shape == (B, L * upp, harmonic_num + 1)
    assert jnp.allclose(uv, uv_r, atol=1e-6)
    assert jnp.allclose(noise, noise_r, atol=1e-5)
    # sine: integer phase-wrap shifts are irrelevant (phase is mod-1 before
    # sin); remaining difference is f32 summation-order noise in the cumsum.
    assert jnp.allclose(sine, sine_r, atol=3e-3)

    print("KERNEL_OK")
</pallas_src>

<mosaic_0001>
module attributes {stable_mosaic.version = 11 : i64} {
  func.func @_sine_kernel(%arg0: i32, %arg1: memref<16x128xf32, #tpu.memory_space<vmem>>, %arg2: memref<128x128xf32, #tpu.memory_space<vmem>>, %arg3: memref<16x128xf32, #tpu.memory_space<vmem>>) attributes {dimension_semantics = [#tpu.dimension_semantics<parallel>], iteration_bounds = array<i64: 2>, scalar_prefetch = 0 : i64, scratch_operands = 0 : i64, tpu.core_type = #tpu.core_type<tc>, window_params = [{transform_indices = @transform_0, window_bounds = array<i64: 16, 128>}, {pipeline_mode = #tpu.pipeline_mode<synchronous>, transform_indices = @transform_1, window_bounds = array<i64: 128, 128>}, {transform_indices = @transform_2, window_bounds = array<i64: 16, 128>}]} {
    %c0 = arith.constant 0 : index
    %c0_0 = arith.constant 0 : index
    %0 = vector.load %arg2[%c0, %c0_0] : memref<128x128xf32, #tpu.memory_space<vmem>>, vector<128x128xf32>
    %c0_1 = arith.constant 0 : index
    %c0_2 = arith.constant 0 : index
    %1 = vector.load %arg1[%c0_1, %c0_2] : memref<16x128xf32, #tpu.memory_space<vmem>>, vector<16x128xf32>
    %cst = arith.constant dense<0.000000e+00> : vector<16x128xf32>
    %2 = tpu.matmul %1, %0, %cst {dimension_numbers = #tpu.dot_dimension_numbers<[1], [0], [0], [1], [0, 0, 1, 1], [], []>, precision = #tpu.contract_precision<fp32>} : vector<16x128xf32>, vector<128x128xf32>, vector<16x128xf32> -> vector<16x128xf32>
    %3 = math.floor %2 : vector<16x128xf32>
    %4 = arith.subf %2, %3 : vector<16x128xf32>
    %cst_3 = arith.constant 6.28318548 : f32
    %5 = vector.broadcast %cst_3 : f32 to vector<16x128xf32>
    %6 = arith.mulf %4, %5 : vector<16x128xf32>
    %7 = math.sin %6 : vector<16x128xf32>
    %cst_4 = arith.constant 1.000000e-01 : f32
    %8 = vector.broadcast %cst_4 : f32 to vector<16x128xf32>
    %9 = arith.mulf %7, %8 : vector<16x128xf32>
    %c0_5 = arith.constant 0 : index
    %c0_6 = arith.constant 0 : index
    %10 = vector.load %arg3[%c0_5, %c0_6] : memref<16x128xf32, #tpu.memory_space<vmem>>, vector<16x128xf32>
    tpu.vector_store %arg3[%c0_5, %c0_6], %9 {strides = array<i32>} : memref<16x128xf32, #tpu.memory_space<vmem>>, vector<16x128xf32>,
    return
  }
  func.func @transform_0(%arg0: i32) -> (i32, i32) {
    %c0_i32 = arith.constant 0 : i32
    %c0_i32_0 = arith.constant 0 : i32
    return %c0_i32, %arg0 : i32, i32
  }
  func.func @transform_1(%arg0: i32) -> (i32, i32) {
    %c0_i32 = arith.constant 0 : i32
    %c0_i32_0 = arith.constant 0 : i32
    %c0_i32_1 = arith.constant 0 : i32
    return %c0_i32, %c0_i32_0 : i32, i32
  }
  func.func @transform_2(%arg0: i32) -> (i32, i32) {
    %c0_i32 = arith.constant 0 : i32
    %c0_i32_0 = arith.constant 0 : i32
    return %c0_i32, %arg0 : i32, i32
  }
}

</mosaic_0001>

<llo_original>
// kernel: tpu_custom_call.1
$region0: #{tpu_custom_call.1}
  #allocation0 [shape = 'u32[]', space=smem, size = 0x4, offset = 0x4, fixed_abs, tag = 'smem constant byte address 0x4 - core index']
  #allocation1 [shape = 'u32[144,128]{1,0:T(1,128)}', space=vmem, size = 0x12000, scoped, tag = 'internal scratch']
  %s0 = inlined_call_operand.hbm [shape: f32[16,256], index: 0, kind: input, shape index: {}]
  %s1 = inlined_call_operand.hbm [shape: f32[128,128], index: 1, kind: input, shape index: {}]
  %s2 = inlined_call_operand.hbm [shape: f32[16,256], index: 2, kind: output, shape index: {}]
  %s3 = sld [smem:[#allocation0]]
  $region49: #{tpu_custom_call.1} parent=0
    _
  %s5 = ssub.s32 1, %s3
  %s6 = scalar_select 0, %s5, %s3
  $region1: #{tpu_custom_call.1} parent=0
    #allocation2 [shape = 'u8[16384]{0}', space=vmem, size = 0x4000, scoped, tag = 'input window, operand 0']
    #allocation3 [shape = 's32[2]{0}', space=sflag, size = 0x8, scoped, tag = 'scoped memory for tpu_custom_call.1']
    #allocation4 [shape = 's32[2]{0}', space=sflag, size = 0x8, scoped, tag = 'scoped memory for tpu_custom_call.1']
    #allocation5 [shape = 'u8[65536]{0}', space=vmem, size = 0x10000, scoped, tag = 'input window, operand 1, single buffered']
    #allocation6 [shape = 's32[1]{0}', space=sflag, size = 0x4, scoped, tag = 'scoped memory for tpu_custom_call.1']
    #allocation7 [shape = 'u8[16384]{0}', space=vmem, size = 0x4000, scoped, tag = 'output window, operand 0']
    %7 = vsyncpa [#allocation3], 0
    %s8 = scalar_lea.sflag [#allocation3], 1
    %9 = vsyncpa %s8, 0
    %10 = vsyncpa [#allocation6], 0
    %11 = vsyncpa [#allocation4], 0
    %s12 = scalar_lea.sflag [#allocation4], 1
    %13 = vsyncpa %s12, 0
    loop: start=0, step=1, limit=4
    $region2: #{tpu_custom_call.1} parent=1 // loop_pre_header
      _
    $region3: #{tpu_custom_call.1} parent=1 // loop_header
      %s15 = sphi 0, %s19
      %p16 = scmp.ge.s32.totalorder %s15, 4
      %s25 = sphi 0, %s27
      %s28 = sphi 0, %s25
      %s29 = sphi 0, %s28
      %s45 = sphi 0, %s29
      %s49 = sphi 0, %s49
      %s51 = sphi 0, %s49
      %s52 = sphi 0, %s51
      %s66 = sphi 0, %s52
      %s72 = sphi 0, %s74
      %s75 = sphi 0, %s72
      %s76 = sphi 0, %s75
      %s92 = sphi 0, %s76
    $region4: #{tpu_custom_call.1} parent=1 // loop_header_branch
      %18 = sbr.rel (%p16) target = $region8
    $region5: #{tpu_custom_call.1} parent=1 // loop_body
      %s20 = ssub.s32 %s15, 1
      %s21 = ssub.s32 %s15, 2
      %s22 = sadd.s32 %s15, 1
      %s23 = ssub.s32 %s15, %s22
      %p24 = scmp.eq.s32.totalorder %s23, 0
      %s26 = sadd.s32 %s25, 1
      %s27 = scalar_select %p24, %s25, %s26
      %p30 = pneg %p24
      %p31 = scmp.eq.s32.totalorder %s15, 1
      %p32 = por %p30, %p31
      %p33 = scmp.ne.s32.totalorder %s25, %s28
      %p34 = scmp.eq.s32.totalorder %s15, 0
      %p35 = por %p33, %p34
      %p36 = scmp.ne.s32.totalorder %s25, %s28
      %p37 = scmp.eq.s32.totalorder %s20, 1
      %p38 = por %p36, %p37
      %p39 = scmp.ne.s32.totalorder %s28, %s29
      %p40 = scmp.eq.s32.totalorder %s20, 0
      %p41 = por %p39, %p40
      %p42 = scmp.ne.s32.totalorder %s28, %s29
      %p43 = scmp.eq.s32.totalorder %s21, 1
      %p44 = por %p42, %p43
      %p46 = scmp.ne.s32.totalorder %s29, %s45
      %p47 = scmp.eq.s32.totalorder %s21, 0
      %p48 = por %p46, %p47
      %s50 = sadd.s32 %s49, 1
      %p53 = scmp.eq.s32.totalorder %s15, 1
      %p54 = scmp.ne.s32.totalorder %s49, %s51
      %p55 = scmp.eq.s32.totalorder %s15, 0
      %p56 = por %p54, %p55
      %p57 = scmp.ne.s32.totalorder %s49, %s51
      %p58 = scmp.eq.s32.totalorder %s20, 1
      %p59 = por %p57, %p58
      %p60 = scmp.ne.s32.totalorder %s51, %s52
      %p61 = scmp.eq.s32.totalorder %s20, 0
      %p62 = por %p60, %p61
      %p63 = scmp.ne.s32.totalorder %s51, %s52
      %p64 = scmp.eq.s32.totalorder %s21, 1
      %p65 = por %p63, %p64
      %p67 = scmp.ne.s32.totalorder %s52, %s66
      %p68 = scmp.eq.s32.totalorder %s21, 0
      %p69 = por %p67, %p68
      %s70 = ssub.s32 %s15, %s22
      %p71 = scmp.eq.s32.totalorder %s70, 0
      %s73 = sadd.s32 %s72, 1
      %s74 = scalar_select %p71, %s72, %s73
      %p77 = pneg %p71
      %p78 = scmp.eq.s32.totalorder %s15, 1
      %p79 = por %p77, %p78
      %p80 = scmp.ne.s32.totalorder %s72, %s75
      %p81 = scmp.eq.s32.totalorder %s15, 0
      %p82 = por %p80, %p81
      %p83 = scmp.ne.s32.totalorder %s72, %s75
      %p84 = scmp.eq.s32.totalorder %s20, 1
      %p85 = por %p83, %p84
      %p86 = scmp.ne.s32.totalorder %s75, %s76
      %p87 = scmp.eq.s32.totalorder %s20, 0
      %p88 = por %p86, %p87
      %p89 = scmp.ne.s32.totalorder %s75, %s76
      %p90 = scmp.eq.s32.totalorder %s21, 1
      %p91 = por %p89, %p90
      %p93 = scmp.ne.s32.totalorder %s76, %s92
      %p94 = scmp.eq.s32.totalorder %s21, 0
      %p95 = por %p93, %p94
      %p96 = scmp.le.s32.totalorder 1, %s15
      %p97 = scmp.lt.s32.totalorder %s15, 3
      %p98 = pnand %p96, %p97
      %p99 = pneg %p98
      // Predicated region
      $region9: #{tpu_custom_call.1} parent=5 // pred_check
        _
      $region10: #{tpu_custom_call.1} parent=5 // pred_check_branch
        %101 = sbr.rel (%p98) target = $region12
      $region11: #{tpu_custom_call.1} parent=5 // pred_region
        %s102 = ssub.s32 %s15, 1
        // Predicated region
        $region13: #{tpu_custom_call.1} parent=11 // pred_check
          %p103 = pneg %p62
        $region14: #{tpu_custom_call.1} parent=11 // pred_check_branch
          %105 = sbr.rel (%p103) target = $region16
        $region15: #{tpu_custom_call.1} parent=11 // pred_region
          %s107 = ssub.s32 2048, 2048
          %108 = vsyncadd [#allocation6], %s107
          %s109 = sshll.u32 [#allocation5], 4
          %s110 = int_to_ptr.vmem [resolvable:$true] %s109
          %115 = dma.hbm_to_vmem [thread:$0]  %s1, 2048, %s110, [#allocation6], 128, 128, 8
        $region16: #{tpu_custom_call.1} parent=11 // pred_fallthru
          _
      $region12: #{tpu_custom_call.1} parent=5 // pred_fallthru
        _
      %p116 = scmp.lt.s32.totalorder %s15, 2
      // Predicated region
      $region17: #{tpu_custom_call.1} parent=5 // pred_check
        %p117 = pneg %p116
      $region18: #{tpu_custom_call.1} parent=5 // pred_check_branch
        %119 = sbr.rel (%p117) target = $region20
      $region19: #{tpu_custom_call.1} parent=5 // pred_region
        // Predicated region
        $region21: #{tpu_custom_call.1} parent=19 // pred_check
          %p120 = pneg %p35
        $region22: #{tpu_custom_call.1} parent=19 // pred_check_branch
          %122 = sbr.rel (%p120) target = $region24
        $region23: #{tpu_custom_call.1} parent=19 // pred_region
          %s123 = sand.u32 %s25, 1
          %s124 = scalar_lea.sflag [#allocation3], %s123
          %s125 = sand.u32 %s25, 1
          %s126 = smul.addr %s125, 16
          %s127 = scalar_lea.vmem [#allocation2], %s126
          %s129 = ssub.s32 256, 256
          %130 = vsyncadd %s124, %s129
          %s131 = smul.addr %s15, 128
          %s132 = scalar_lea.hbm %s0, %s131
          %s133 = sshll.u32 %s127, 4
          %s134 = int_to_ptr.vmem [resolvable:$true] %s133
          %139 = dma.hbm_to_vmem [thread:$0]  %s132, 256, %s134, %s124, 256, 128, 8
        $region24: #{tpu_custom_call.1} parent=19 // pred_fallthru
          _
      $region20: #{tpu_custom_call.1} parent=5 // pred_fallthru
        _
      %p140 = scmp.le.s32.totalorder 1, %s15
      %p141 = scmp.lt.s32.totalorder %s15, 3
      %p142 = pnand %p140, %p141
      %p143 = pneg %p142
      // Predicated region
      $region25: #{tpu_custom_call.1} parent=5 // pred_check
        _
      $region26: #{tpu_custom_call.1} parent=5 // pred_check_branch
        %145 = sbr.rel (%p142) target = $region28
      $region27: #{tpu_custom_call.1} parent=5 // pred_region
        %s146 = ssub.s32 %s15, 1
        %s147 = sand.u32 %s28, 1
        %s148 = scalar_lea.sflag [#allocation3], %s147
        %s149 = sand.u32 %s28, 1
        %s150 = smul.addr %s149, 16
        %s151 = scalar_lea.vmem [#allocation2], %s150
        // Predicated region
        $region29: #{tpu_custom_call.1} parent=27 // pred_check
          %p152 = pneg %p41
        $region30: #{tpu_custom_call.1} parent=27 // pred_check_branch
          %154 = sbr.rel (%p152) target = $region32
        $region31: #{tpu_custom_call.1} parent=27 // pred_region
          %155 = dma.done %s148, 256
        $region32: #{tpu_custom_call.1} parent=27 // pred_fallthru
          _
        // Predicated region
        $region33: #{tpu_custom_call.1} parent=27 // pred_check
          %p156 = pneg %p62
        $region34: #{tpu_custom_call.1} parent=27 // pred_check_branch
          %158 = sbr.rel (%p156) target = $region36
        $region35: #{tpu_custom_call.1} parent=27 // pred_region
          %159 = dma.done [#allocation6], 2048
        $region36: #{tpu_custom_call.1} parent=27 // pred_fallthru
          _
        %s160 = sand.u32 %s28, 1
        %s161 = scalar_lea.sflag [#allocation3], %s160
        %s162 = sand.u32 %s28, 1
        %s163 = smul.addr %s162, 16
        %s164 = scalar_lea.vmem [#allocation2], %s163
        %p165 = pneg %p41
        %p166 = pneg %p38
        %p167 = pneg %p62
        %p168 = pneg %p59
        %p169 = pneg %p88
        %p170 = pneg %p85
        %s171 = sand.u32 %s75, 1
        %s172 = scalar_lea.sflag [#allocation4], %s171
        %s173 = sand.u32 %s75, 1
        %s174 = smul.addr %s173, 16
        %s175 = scalar_lea.vmem [#allocation7], %s174
        %v176 = vld [vmem:[#allocation5] sm:$0xff]
        %v177 = vld [vmem:[#allocation5 + $0x8] sm:$0xff]
        %v178 = vld [vmem:[#allocation5 + $0x10] sm:$0xff]
        %v179 = vld [vmem:[#allocation5 + $0x18] sm:$0xff]
        %v180 = vld [vmem:[#allocation5 + $0x20] sm:$0xff]
        %v181 = vld [vmem:[#allocation5 + $0x28] sm:$0xff]
        %v182 = vld [vmem:[#allocation5 + $0x30] sm:$0xff]
        %v183 = vld [vmem:[#allocation5 + $0x38] sm:$0xff]
        %v184 = vld [vmem:[#allocation5 + $0x40] sm:$0xff]
        %v185 = vld [vmem:[#allocation5 + $0x48] sm:$0xff]
        %v186 = vld [vmem:[#allocation5 + $0x50] sm:$0xff]
        %v187 = vld [vmem:[#allocation5 + $0x58] sm:$0xff]
        %v188 = vld [vmem:[#allocation5 + $0x60] sm:$0xff]
        %v189 = vld [vmem:[#allocation5 + $0x68] sm:$0xff]
        %v190 = vld [vmem:[#allocation5 + $0x70] sm:$0xff]
        %v191 = vld [vmem:[#allocation5 + $0x78] sm:$0xff]
        %v192 = vld [vmem:[%s151] sm:$0xff]
        %v193 = vld [vmem:[%s151 + $0x8] sm:$0xff]
        %194 = vmatprep.subr.mxu0 0.0
        %v195 = vand.u32 %v176, 4294901760
        %196 = vmatpush1.msra.mxu0 %v195
        %197 = vmatprep.subr.mxu0 0.0
        %v198 = vand.u32 %v177, 4294901760
        %199 = vmatpush1.msra.mxu0 %v198
        %200 = vmatprep.subr.mxu0 0.0
        %v201 = vand.u32 %v178, 4294901760
        %202 = vmatpush1.msra.mxu0 %v201
        %203 = vmatprep.subr.mxu0 0.0
        %v204 = vand.u32 %v179, 4294901760
        %205 = vmatpush1.msra.mxu0 %v204
        %206 = vmatprep.subr.mxu0 0.0
        %v207 = vand.u32 %v180, 4294901760
        %208 = vmatpush1.msra.mxu0 %v207
        %209 = vmatprep.subr.mxu0 0.0
        %v210 = vand.u32 %v181, 4294901760
        %211 = vmatpush1.msra.mxu0 %v210
        %212 = vmatprep.subr.mxu0 0.0
        %v213 = vand.u32 %v182, 4294901760
        %214 = vmatpush1.msra.mxu0 %v213
        %215 = vmatprep.subr.mxu0 0.0
        %v216 = vand.u32 %v183, 4294901760
        %217 = vmatpush1.msra.mxu0 %v216
        %218 = vmatprep.subr.mxu0 0.0
        %v219 = vand.u32 %v184, 4294901760
        %220 = vmatpush1.msra.mxu0 %v219
        %221 = vmatprep.subr.mxu0 0.0
        %v222 = vand.u32 %v185, 4294901760
        %223 = vmatpush1.msra.mxu0 %v222
        %224 = vmatprep.subr.mxu0 0.0
        %v225 = vand.u32 %v186, 4294901760
        %226 = vmatpush1.msra.mxu0 %v225
        %227 = vmatprep.subr.mxu0 0.0
        %v228 = vand.u32 %v187, 4294901760
        %229 = vmatpush1.msra.mxu0 %v228
        %230 = vmatprep.subr.mxu0 0.0
        %v231 = vand.u32 %v188, 4294901760
        %232 = vmatpush1.msra.mxu0 %v231
        %233 = vmatprep.subr.mxu0 0.0
        %v234 = vand.u32 %v189, 4294901760
        %235 = vmatpush1.msra.mxu0 %v234
        %236 = vmatprep.subr.mxu0 0.0
        %v237 = vand.u32 %v190, 4294901760
        %238 = vmatpush1.msra.mxu0 %v237
        %239 = vmatprep.subr.mxu0 0.0
        %v240 = vand.u32 %v191, 4294901760
        %241 = vmatpush1.msra.mxu0 %v240
        %242 = vmatprep.subr.mxu0 0.0
        %243 = vmatpush1.msra.mxu0 0.0
        %244 = vmatprep.subr.mxu0 0.0
        %245 = vmatpush1.msra.mxu0 0.0
        %246 = vmatprep.subr.mxu0 0.0
        %247 = vmatpush1.msra.mxu0 0.0
        %248 = vmatprep.subr.mxu0 0.0
        %249 = vmatpush1.msra.mxu0 0.0
        %250 = vmatprep.subr.mxu0 0.0
        %251 = vmatpush1.msra.mxu0 0.0
        %252 = vmatprep.subr.mxu0 0.0
        %253 = vmatpush1.msra.mxu0 0.0
        %254 = vmatprep.subr.mxu0 0.0
        %255 = vmatpush1.msra.mxu0 0.0
        %256 = vmatprep.subr.mxu0 0.0
        %257 = vmatpush1.msra.mxu0 0.0
        %258 = vmatprep.subr.mxu0 0.0
        %259 = vmatpush1.msra.mxu0 0.0
        %260 = vmatprep.subr.mxu0 0.0
        %261 = vmatpush1.msra.mxu0 0.0
        %262 = vmatprep.subr.mxu0 0.0
        %263 = vmatpush1.msra.mxu0 0.0
        %264 = vmatprep.subr.mxu0 0.0
        %265 = vmatpush1.msra.mxu0 0.0
        %266 = vmatprep.subr.mxu0 0.0
        %267 = vmatpush1.msra.mxu0 0.0
        %268 = vmatprep.subr.mxu0 0.0
        %269 = vmatpush1.msra.mxu0 0.0
        %270 = vmatprep.subr.mxu0 0.0
        %271 = vmatpush1.msra.mxu0 0.0
        %272 = vmatprep.subr.mxu0 0.0
        %273 = vmatpush1.msra.mxu0 0.0
        %274 = vmatprep.mubr.f32.mxu0 0.0
        %v275 = vand.u32 %v192, 4294901760
        %v276 = vsub.f32 %v192, %v275
        %v277 = vand.u32 %v276, 4294901760
        %v278 = vsub.f32 %v276, %v277
        %v279 = vand.u32 %v278, 4294901760
        %280 = vmatmul.mubr.f32.gmra.mrb[0].mxu0 %v279
        %v281 = vpop.f32.mrb[0].mxu0
        %v282 = vadd.f32 0.0, %v281
        %v283 = vpop.f32.mrb[0].mxu0
        %284 = vmatprep.mubr.f32.mxu0 0.0
        %v285 = vand.u32 %v193, 4294901760
        %v286 = vsub.f32 %v193, %v285
        %v287 = vand.u32 %v286, 4294901760
        %v288 = vsub.f32 %v286, %v287
        %v289 = vand.u32 %v288, 4294901760
        %290 = vmatmul.mubr.f32.gmra.mrb[0].mxu0 %v289
        %v291 = vpop.f32.mrb[0].mxu0
        %v292 = vadd.f32 0.0, %v291
        %v293 = vpop.f32.mrb[0].mxu0
        %294 = vdwg.mxu0
        %295 = vmatprep.subr.mxu0 0.0
        %v296 = vand.u32 %v176, 4294901760
        %v297 = vsub.f32 %v176, %v296
        %v298 = vand.u32 %v297, 4294901760
        %v299 = vsub.f32 %v297, %v298
        %v300 = vand.u32 %v299, 4294901760
        %301 = vmatpush1.msra.mxu0 %v300
        %302 = vmatprep.subr.mxu0 0.0
        %v303 = vand.u32 %v177, 4294901760
        %v304 = vsub.f32 %v177, %v303
        %v305 = vand.u32 %v304, 4294901760
        %v306 = vsub.f32 %v304, %v305
        %v307 = vand.u32 %v306, 4294901760
        %308 = vmatpush1.msra.mxu0 %v307
        %309 = vmatprep.subr.mxu0 0.0
        %v310 = vand.u32 %v178, 4294901760
        %v311 = vsub.f32 %v178, %v310
        %v312 = vand.u32 %v311, 4294901760
        %v313 = vsub.f32 %v311, %v312
        %v314 = vand.u32 %v313, 4294901760
        %315 = vmatpush1.msra.mxu0 %v314
        %316 = vmatprep.subr.mxu0 0.0
        %v317 = vand.u32 %v179, 4294901760
        %v318 = vsub.f32 %v179, %v317
        %v319 = vand.u32 %v318, 4294901760
        %v320 = vsub.f32 %v318, %v319
        %v321 = vand.u32 %v320, 4294901760
        %322 = vmatpush1.msra.mxu0 %v321
        %323 = vmatprep.subr.mxu0 0.0
        %v324 = vand.u32 %v180, 4294901760
        %v325 = vsub.f32 %v180, %v324
        %v326 = vand.u32 %v325, 4294901760
        %v327 = vsub.f32 %v325, %v326
        %v328 = vand.u32 %v327, 4294901760
        %329 = vmatpush1.msra.mxu0 %v328
        %330 = vmatprep.subr.mxu0 0.0
        %v331 = vand.u32 %v181, 4294901760
        %v332 = vsub.f32 %v181, %v331
        %v333 = vand.u32 %v332, 4294901760
        %v334 = vsub.f32 %v332, %v333
        %v335 = vand.u32 %v334, 4294901760
        %336 = vmatpush1.msra.mxu0 %v335
        %337 = vmatprep.subr.mxu0 0.0
        %v338 = vand.u32 %v182, 4294901760
        %v339 = vsub.f32 %v182, %v338
        %v340 = vand.u32 %v339, 4294901760
        %v341 = vsub.f32 %v339, %v340
        %v342 = vand.u32 %v341, 4294901760
        %343 = vmatpush1.msra.mxu0 %v342
        %344 = vmatprep.subr.mxu0 0.0
        %v345 = vand.u32 %v183, 4294901760
        %v346 = vsub.f32 %v183, %v345
        %v347 = vand.u32 %v346, 4294901760
        %v348 = vsub.f32 %v346, %v347
        %v349 = vand.u32 %v348, 4294901760
        %350 = vmatpush1.msra.mxu0 %v349
        %351 = vmatprep.subr.mxu0 0.0
        %v352 = vand.u32 %v184, 4294901760
        %v353 = vsub.f32 %v184, %v352
        %v354 = vand.u32 %v353, 4294901760
        %v355 = vsub.f32 %v353, %v354
        %v356 = vand.u32 %v355, 4294901760
        %357 = vmatpush1.msra.mxu0 %v356
        %358 = vmatprep.subr.mxu0 0.0
        %v359 = vand.u32 %v185, 4294901760
        %v360 = vsub.f32 %v185, %v359
        %v361 = vand.u32 %v360, 4294901760
        %v362 = vsub.f32 %v360, %v361
        %v363 = vand.u32 %v362, 4294901760
        %364 = vmatpush1.msra.mxu0 %v363
        %365 = vmatprep.subr.mxu0 0.0
        %v366 = vand.u32 %v186, 4294901760
        %v367 = vsub.f32 %v186, %v366
        %v368 = vand.u32 %v367, 4294901760
        %v369 = vsub.f32 %v367, %v368
        %v370 = vand.u32 %v369, 4294901760
        %371 = vmatpush1.msra.mxu0 %v370
        %372 = vmatprep.subr.mxu0 0.0
        %v373 = vand.u32 %v187, 4294901760
        %v374 = vsub.f32 %v187, %v373
        %v375 = vand.u32 %v374, 4294901760
        %v376 = vsub.f32 %v374, %v375
        %v377 = vand.u32 %v376, 4294901760
        %378 = vmatpush1.msra.mxu0 %v377
        %379 = vmatprep.subr.mxu0 0.0
        %v380 = vand.u32 %v188, 4294901760
        %v381 = vsub.f32 %v188, %v380
        %v382 = vand.u32 %v381, 4294901760
        %v383 = vsub.f32 %v381, %v382
        %v384 = vand.u32 %v383, 4294901760
        %385 = vmatpush1.msra.mxu0 %v384
        %386 = vmatprep.subr.mxu0 0.0
        %v387 = vand.u32 %v189, 4294901760
        %v388 = vsub.f32 %v189, %v387
        %v389 = vand.u32 %v388, 4294901760
        %v390 = vsub.f32 %v388, %v389
        %v391 = vand.u32 %v390, 4294901760
        %392 = vmatpush1.msra.mxu0 %v391
        %393 = vmatprep.subr.mxu0 0.0
        %v394 = vand.u32 %v190, 4294901760
        %v395 = vsub.f32 %v190, %v394
        %v396 = vand.u32 %v395, 4294901760
        %v397 = vsub.f32 %v395, %v396
        %v398 = vand.u32 %v397, 4294901760
        %399 = vmatpush1.msra.mxu0 %v398
        %400 = vmatprep.subr.mxu0 0.0
        %v401 = vand.u32 %v191, 4294901760
        %v402 = vsub.f32 %v191, %v401
        %v403 = vand.u32 %v402, 4294901760
        %v404 = vsub.f32 %v402, %v403
        %v405 = vand.u32 %v404, 4294901760
        %406 = vmatpush1.msra.mxu0 %v405
        %407 = vmatprep.subr.mxu0 0.0
        %408 = vmatpush1.msra.mxu0 0.0
        %409 = vmatprep.subr.mxu0 0.0
        %410 = vmatpush1.msra.mxu0 0.0
        %411 = vmatprep.subr.mxu0 0.0
        %412 = vmatpush1.msra.mxu0 0.0
        %413 = vmatprep.subr.mxu0 0.0
        %414 = vmatpush1.msra.mxu0 0.0
        %415 = vmatprep.subr.mxu0 0.0
        %416 = vmatpush1.msra.mxu0 0.0
        %417 = vmatprep.subr.mxu0 0.0
        %418 = vmatpush1.msra.mxu0 0.0
        %419 = vmatprep.subr.mxu0 0.0
        %420 = vmatpush1.msra.mxu0 0.0
        %421 = vmatprep.subr.mxu0 0.0
        %422 = vmatpush1.msra.mxu0 0.0
        %423 = vmatprep.subr.mxu0 0.0
        %424 = vmatpush1.msra.mxu0 0.0
        %425 = vmatprep.subr.mxu0 0.0
        %426 = vmatpush1.msra.mxu0 0.0
        %427 = vmatprep.subr.mxu0 0.0
        %428 = vmatpush1.msra.mxu0 0.0
        %429 = vmatprep.subr.mxu0 0.0
        %430 = vmatpush1.msra.mxu0 0.0
        %431 = vmatprep.subr.mxu0 0.0
        %432 = vmatpush1.msra.mxu0 0.0
        %433 = vmatprep.subr.mxu0 0.0
        %434 = vmatpush1.msra.mxu0 0.0
        %435 = vmatprep.subr.mxu0 0.0
        %436 = vmatpush1.msra.mxu0 0.0
        %437 = vmatprep.subr.mxu0 0.0
        %438 = vmatpush1.msra.mxu0 0.0
        %439 = vmatprep.mubr.f32.mxu0 0.0
        %v440 = vand.u32 %v192, 4294901760
        %441 = vmatmul.mubr.f32.gmra.mrb[0].mxu0 %v440
        %v442 = vpop.f32.mrb[0].mxu0
        %v443 = vadd.f32 %v282, %v442
        %v444 = vpop.f32.mrb[0].mxu0
        %445 = vmatprep.mubr.f32.mxu0 0.0
        %v446 = vand.u32 %v193, 4294901760
        %447 = vmatmul.mubr.f32.gmra.mrb[0].mxu0 %v446
        %v448 = vpop.f32.mrb[0].mxu0
        %v449 = vadd.f32 %v292, %v448
        %v450 = vpop.f32.mrb[0].mxu0
        %451 = vdwg.mxu0
        %452 = vmatprep.subr.mxu0 0.0
        %v453 = vand.u32 %v176, 4294901760
        %v454 = vsub.f32 %v176, %v453
        %455 = vmatpush1.msra.mxu0 %v454
        %456 = vmatprep.subr.mxu0 0.0
        %v457 = vand.u32 %v177, 4294901760
        %v458 = vsub.f32 %v177, %v457
        %459 = vmatpush1.msra.mxu0 %v458
        %460 = vmatprep.subr.mxu0 0.0
        %v461 = vand.u32 %v178, 4294901760
        %v462 = vsub.f32 %v178, %v461
        %463 = vmatpush1.msra.mxu0 %v462
        %464 = vmatprep.subr.mxu0 0.0
        %v465 = vand.u32 %v179, 4294901760
        %v466 = vsub.f32 %v179, %v465
        %467 = vmatpush1.msra.mxu0 %v466
        %468 = vmatprep.subr.mxu0 0.0
        %v469 = vand.u32 %v180, 4294901760
        %v470 = vsub.f32 %v180, %v469
        %471 = vmatpush1.msra.mxu0 %v470
        %472 = vmatprep.subr.mxu0 0.0
        %v473 = vand.u32 %v181, 4294901760
        %v474 = vsub.f32 %v181, %v473
        %475 = vmatpush1.msra.mxu0 %v474
        %476 = vmatprep.subr.mxu0 0.0
        %v477 = vand.u32 %v182, 4294901760
        %v478 = vsub.f32 %v182, %v477
        %479 = vmatpush1.msra.mxu0 %v478
        %480 = vmatprep.subr.mxu0 0.0
        %v481 = vand.u32 %v183, 4294901760
        %v482 = vsub.f32 %v183, %v481
        %483 = vmatpush1.msra.mxu0 %v482
        %484 = vmatprep.subr.mxu0 0.0
        %v485 = vand.u32 %v184, 4294901760
        %v486 = vsub.f32 %v184, %v485
        %487 = vmatpush1.msra.mxu0 %v486
        %488 = vmatprep.subr.mxu0 0.0
        %v489 = vand.u32 %v185, 4294901760
        %v490 = vsub.f32 %v185, %v489
        %491 = vmatpush1.msra.mxu0 %v490
        %492 = vmatprep.subr.mxu0 0.0
        %v493 = vand.u32 %v186, 4294901760
        %v494 = vsub.f32 %v186, %v493
        %495 = vmatpush1.msra.mxu0 %v494
        %496 = vmatprep.subr.mxu0 0.0
        %v497 = vand.u32 %v187, 4294901760
        %v498 = vsub.f32 %v187, %v497
        %499 = vmatpush1.msra.mxu0 %v498
        %500 = vmatprep.subr.mxu0 0.0
        %v501 = vand.u32 %v188, 4294901760
        %v502 = vsub.f32 %v188, %v501
        %503 = vmatpush1.msra.mxu0 %v502
        %504 = vmatprep.subr.mxu0 0.0
        %v505 = vand.u32 %v189, 4294901760
        %v506 = vsub.f32 %v189, %v505
        %507 = vmatpush1.msra.mxu0 %v506
        %508 = vmatprep.subr.mxu0 0.0
        %v509 = vand.u32 %v190, 4294901760
        %v510 = vsub.f32 %v190, %v509
        %511 = vmatpush1.msra.mxu0 %v510
        %512 = vmatprep.subr.mxu0 0.0
        %v513 = vand.u32 %v191, 4294901760
        %v514 = vsub.f32 %v191, %v513
        %515 = vmatpush1.msra.mxu0 %v514
        %516 = vmatprep.subr.mxu0 0.0
        %517 = vmatpush1.msra.mxu0 0.0
        %518 = vmatprep.subr.mxu0 0.0
        %519 = vmatpush1.msra.mxu0 0.0
        %520 = vmatprep.subr.mxu0 0.0
        %521 = vmatpush1.msra.mxu0 0.0
        %522 = vmatprep.subr.mxu0 0.0
        %523 = vmatpush1.msra.mxu0 0.0
        %524 = vmatprep.subr.mxu0 0.0
        %525 = vmatpush1.msra.mxu0 0.0
        %526 = vmatprep.subr.mxu0 0.0
        %527 = vmatpush1.msra.mxu0 0.0
        %528 = vmatprep.subr.mxu0 0.0
        %529 = vmatpush1.msra.mxu0 0.0
        %530 = vmatprep.subr.mxu0 0.0
        %531 = vmatpush1.msra.mxu0 0.0
        %532 = vmatprep.subr.mxu0 0.0
        %533 = vmatpush1.msra.mxu0 0.0
        %534 = vmatprep.subr.mxu0 0.0
        %535 = vmatpush1.msra.mxu0 0.0
        %536 = vmatprep.subr.mxu0 0.0
        %537 = vmatpush1.msra.mxu0 0.0
        %538 = vmatprep.subr.mxu0 0.0
        %539 = vmatpush1.msra.mxu0 0.0
        %540 = vmatprep.subr.mxu0 0.0
        %541 = vmatpush1.msra.mxu0 0.0
        %542 = vmatprep.subr.mxu0 0.0
        %543 = vmatpush1.msra.mxu0 0.0
        %544 = vmatprep.subr.mxu0 0.0
        %545 = vmatpush1.msra.mxu0 0.0
        %546 = vmatprep.subr.mxu0 0.0
        %547 = vmatpush1.msra.mxu0 0.0
        %548 = vmatprep.mubr.f32.mxu0 0.0
        %v549 = vand.u32 %v192, 4294901760
        %v550 = vsub.f32 %v192, %v549
        %551 = vmatmul.mubr.f32.gmra.mrb[0].mxu0 %v550
        %v552 = vpop.f32.mrb[0].mxu0
        %v553 = vadd.f32 %v443, %v552
        %v554 = vpop.f32.mrb[0].mxu0
        %555 = vmatprep.mubr.f32.mxu0 0.0
        %v556 = vand.u32 %v193, 4294901760
        %v557 = vsub.f32 %v193, %v556
        %558 = vmatmul.mubr.f32.gmra.mrb[0].mxu0 %v557
        %v559 = vpop.f32.mrb[0].mxu0
        %v560 = vadd.f32 %v449, %v559
        %v561 = vpop.f32.mrb[0].mxu0
        %562 = vdwg.mxu0
        %563 = vmatprep.subr.mxu0 0.0
        %v564 = vand.u32 %v176, 4294901760
        %565 = vmatpush1.msra.mxu0 %v564
        %566 = vmatprep.subr.mxu0 0.0
        %v567 = vand.u32 %v177, 4294901760
        %568 = vmatpush1.msra.mxu0 %v567
        %569 = vmatprep.subr.mxu0 0.0
        %v570 = vand.u32 %v178, 4294901760
        %571 = vmatpush1.msra.mxu0 %v570
        %572 = vmatprep.subr.mxu0 0.0
        %v573 = vand.u32 %v179, 4294901760
        %574 = vmatpush1.msra.mxu0 %v573
        %575 = vmatprep.subr.mxu0 0.0
        %v576 = vand.u32 %v180, 4294901760
        %577 = vmatpush1.msra.mxu0 %v576
        %578 = vmatprep.subr.mxu0 0.0
        %v579 = vand.u32 %v181, 4294901760
        %580 = vmatpush1.msra.mxu0 %v579
        %581 = vmatprep.subr.mxu0 0.0
        %v582 = vand.u32 %v182, 4294901760
        %583 = vmatpush1.msra.mxu0 %v582
        %584 = vmatprep.subr.mxu0 0.0
        %v585 = vand.u32 %v183, 4294901760
        %586 = vmatpush1.msra.mxu0 %v585
        %587 = vmatprep.subr.mxu0 0.0
        %v588 = vand.u32 %v184, 4294901760
        %589 = vmatpush1.msra.mxu0 %v588
        %590 = vmatprep.subr.mxu0 0.0
        %v591 = vand.u32 %v185, 4294901760
        %592 = vmatpush1.msra.mxu0 %v591
        %593 = vmatprep.subr.mxu0 0.0
        %v594 = vand.u32 %v186, 4294901760
        %595 = vmatpush1.msra.mxu0 %v594
        %596 = vmatprep.subr.mxu0 0.0
        %v597 = vand.u32 %v187, 4294901760
        %598 = vmatpush1.msra.mxu0 %v597
        %599 = vmatprep.subr.mxu0 0.0
        %v600 = vand.u32 %v188, 4294901760
        %601 = vmatpush1.msra.mxu0 %v600
        %602 = vmatprep.subr.mxu0 0.0
        %v603 = vand.u32 %v189, 4294901760
        %604 = vmatpush1.msra.mxu0 %v603
        %605 = vmatprep.subr.mxu0 0.0
        %v606 = vand.u32 %v190, 4294901760
        %607 = vmatpush1.msra.mxu0 %v606
        %608 = vmatprep.subr.mxu0 0.0
        %v609 = vand.u32 %v191, 4294901760
        %610 = vmatpush1.msra.mxu0 %v609
        %611 = vmatprep.subr.mxu0 0.0
        %612 = vmatpush1.msra.mxu0 0.0
        %613 = vmatprep.subr.mxu0 0.0
        %614 = vmatpush1.msra.mxu0 0.0
        %615 = vmatprep.subr.mxu0 0.0
        %616 = vmatpush1.msra.mxu0 0.0
        %617 = vmatprep.subr.mxu0 0.0
        %618 = vmatpush1.msra.mxu0 0.0
        %619 = vmatprep.subr.mxu0 0.0
        %620 = vmatpush1.msra.mxu0 0.0
        %621 = vmatprep.subr.mxu0 0.0
        %622 = vmatpush1.msra.mxu0 0.0
        %623 = vmatprep.subr.mxu0 0.0
        %624 = vmatpush1.msra.mxu0 0.0
        %625 = vmatprep.subr.mxu0 0.0
        %626 = vmatpush1.msra.mxu0 0.0
        %627 = vmatprep.subr.mxu0 0.0
        %628 = vmatpush1.msra.mxu0 0.0
        %629 = vmatprep.subr.mxu0 0.0
        %630 = vmatpush1.msra.mxu0 0.0
        %631 = vmatprep.subr.mxu0 0.0
        %632 = vmatpush1.msra.mxu0 0.0
        %633 = vmatprep.subr.mxu0 0.0
        %634 = vmatpush1.msra.mxu0 0.0
        %635 = vmatprep.subr.mxu0 0.0
        %636 = vmatpush1.msra.mxu0 0.0
        %637 = vmatprep.subr.mxu0 0.0
        %638 = vmatpush1.msra.mxu0 0.0
        %639 = vmatprep.subr.mxu0 0.0
        %640 = vmatpush1.msra.mxu0 0.0
        %641 = vmatprep.subr.mxu0 0.0
        %642 = vmatpush1.msra.mxu0 0.0
        %643 = vmatprep.mubr.f32.mxu0 0.0
        %v644 = vand.u32 %v192, 4294901760
        %v645 = vsub.f32 %v192, %v644
        %v646 = vand.u32 %v645, 4294901760
        %647 = vmatmul.mubr.f32.gmra.mrb[0].mxu0 %v646
        %v648 = vpop.f32.mrb[0].mxu0
        %v649 = vadd.f32 %v553, %v648
        %v650 = vpop.f32.mrb[0].mxu0
        %651 = vmatprep.mubr.f32.mxu0 0.0
        %v652 = vand.u32 %v193, 4294901760
        %v653 = vsub.f32 %v193, %v652
        %v654 = vand.u32 %v653, 4294901760
        %655 = vmatmul.mubr.f32.gmra.mrb[0].mxu0 %v654
        %v656 = vpop.f32.mrb[0].mxu0
        %v657 = vadd.f32 %v560, %v656
        %v658 = vpop.f32.mrb[0].mxu0
        %659 = vdwg.mxu0
        %660 = vmatprep.subr.mxu0 0.0
        %v661 = vand.u32 %v176, 4294901760
        %v662 = vsub.f32 %v176, %v661
        %v663 = vand.u32 %v662, 4294901760
        %664 = vmatpush1.msra.mxu0 %v663
        %665 = vmatprep.subr.mxu0 0.0
        %v666 = vand.u32 %v177, 4294901760
        %v667 = vsub.f32 %v177, %v666
        %v668 = vand.u32 %v667, 4294901760
        %669 = vmatpush1.msra.mxu0 %v668
        %670 = vmatprep.subr.mxu0 0.0
        %v671 = vand.u32 %v178, 4294901760
        %v672 = vsub.f32 %v178, %v671
        %v673 = vand.u32 %v672, 4294901760
        %674 = vmatpush1.msra.mxu0 %v673
        %675 = vmatprep.subr.mxu0 0.0
        %v676 = vand.u32 %v179, 4294901760
        %v677 = vsub.f32 %v179, %v676
        %v678 = vand.u32 %v677, 4294901760
        %679 = vmatpush1.msra.mxu0 %v678
        %680 = vmatprep.subr.mxu0 0.0
        %v681 = vand.u32 %v180, 4294901760
        %v682 = vsub.f32 %v180, %v681
        %v683 = vand.u32 %v682, 4294901760
        %684 = vmatpush1.msra.mxu0 %v683
        %685 = vmatprep.subr.mxu0 0.0
        %v686 = vand.u32 %v181, 4294901760
        %v687 = vsub.f32 %v181, %v686
        %v688 = vand.u32 %v687, 4294901760
        %689 = vmatpush1.msra.mxu0 %v688
        %690 = vmatprep.subr.mxu0 0.0
        %v691 = vand.u32 %v182, 4294901760
        %v692 = vsub.f32 %v182, %v691
        %v693 = vand.u32 %v692, 4294901760
        %694 = vmatpush1.msra.mxu0 %v693
        %695 = vmatprep.subr.mxu0 0.0
        %v696 = vand.u32 %v183, 4294901760
        %v697 = vsub.f32 %v183, %v696
        %v698 = vand.u32 %v697, 4294901760
        %699 = vmatpush1.msra.mxu0 %v698
        %700 = vmatprep.subr.mxu0 0.0
        %v701 = vand.u32 %v184, 4294901760
        %v702 = vsub.f32 %v184, %v701
        %v703 = vand.u32 %v702, 4294901760
        %704 = vmatpush1.msra.mxu0 %v703
        %705 = vmatprep.subr.mxu0 0.0
        %v706 = vand.u32 %v185, 4294901760
        %v707 = vsub.f32 %v185, %v706
        %v708 = vand.u32 %v707, 4294901760
        %709 = vmatpush1.msra.mxu0 %v708
        %710 = vmatprep.subr.mxu0 0.0
        %v711 = vand.u32 %v186, 4294901760
        %v712 = vsub.f32 %v186, %v711
        %v713 = vand.u32 %v712, 4294901760
        %714 = vmatpush1.msra.mxu0 %v713
        %715 = vmatprep.subr.mxu0 0.0
        %v716 = vand.u32 %v187, 4294901760
        %v717 = vsub.f32 %v187, %v716
        %v718 = vand.u32 %v717, 4294901760
        %719 = vmatpush1.msra.mxu0 %v718
        %720 = vmatprep.subr.mxu0 0.0
        %v721 = vand.u32 %v188, 4294901760
        %v722 = vsub.f32 %v188, %v721
        %v723 = vand.u32 %v722, 4294901760
        %724 = vmatpush1.msra.mxu0 %v723
        %725 = vmatprep.subr.mxu0 0.0
        %v726 = vand.u32 %v189, 4294901760
        %v727 = vsub.f32 %v189, %v726
        %v728 = vand.u32 %v727, 4294901760
        %729 = vmatpush1.msra.mxu0 %v728
        %730 = vmatprep.subr.mxu0 0.0
        %v731 = vand.u32 %v190, 4294901760
        %v732 = vsub.f32 %v190, %v731
        %v733 = vand.u32 %v732, 4294901760
        %734 = vmatpush1.msra.mxu0 %v733
        %735 = vmatprep.subr.mxu0 0.0
        %v736 = vand.u32 %v191, 4294901760
        %v737 = vsub.f32 %v191, %v736
        %v738 = vand.u32 %v737, 4294901760
        %739 = vmatpush1.msra.mxu0 %v738
        %740 = vmatprep.subr.mxu0 0.0
        %741 = vmatpush1.msra.mxu0 0.0
        %742 = vmatprep.subr.mxu0 0.0
        %743 = vmatpush1.msra.mxu0 0.0
        %744 = vmatprep.subr.mxu0 0.0
        %745 = vmatpush1.msra.mxu0 0.0
        %746 = vmatprep.subr.mxu0 0.0
        %747 = vmatpush1.msra.mxu0 0.0
        %748 = vmatprep.subr.mxu0 0.0
        %749 = vmatpush1.msra.mxu0 0.0
        %750 = vmatprep.subr.mxu0 0.0
        %751 = vmatpush1.msra.mxu0 0.0
        %752 = vmatprep.subr.mxu0 0.0
        %753 = vmatpush1.msra.mxu0 0.0
        %754 = vmatprep.subr.mxu0 0.0
        %755 = vmatpush1.msra.mxu0 0.0
        %756 = vmatprep.subr.mxu0 0.0
        %757 = vmatpush1.msra.mxu0 0.0
        %758 = vmatprep.subr.mxu0 0.0
        %759 = vmatpush1.msra.mxu0 0.0
        %760 = vmatprep.subr.mxu0 0.0
        %761 = vmatpush1.msra.mxu0 0.0
        %762 = vmatprep.subr.mxu0 0.0
        %763 = vmatpush1.msra.mxu0 0.0
        %764 = vmatprep.subr.mxu0 0.0
        %765 = vmatpush1.msra.mxu0 0.0
        %766 = vmatprep.subr.mxu0 0.0
        %767 = vmatpush1.msra.mxu0 0.0
        %768 = vmatprep.subr.mxu0 0.0
        %769 = vmatpush1.msra.mxu0 0.0
        %770 = vmatprep.subr.mxu0 0.0
        %771 = vmatpush1.msra.mxu0 0.0
        %772 = vmatprep.mubr.f32.mxu0 0.0
        %v773 = vand.u32 %v192, 4294901760
        %774 = vmatmul.mubr.f32.gmra.mrb[0].mxu0 %v773
        %v775 = vpop.f32.mrb[0].mxu0
        %v776 = vadd.f32 %v649, %v775
        %v777 = vpop.f32.mrb[0].mxu0
        %778 = vmatprep.mubr.f32.mxu0 0.0
        %v779 = vand.u32 %v193, 4294901760
        %780 = vmatmul.mubr.f32.gmra.mrb[0].mxu0 %v779
        %v781 = vpop.f32.mrb[0].mxu0
        %v782 = vadd.f32 %v657, %v781
        %v783 = vpop.f32.mrb[0].mxu0
        %784 = vdwg.mxu0
        %785 = vmatprep.subr.mxu0 0.0
        %v786 = vand.u32 %v176, 4294901760
        %787 = vmatpush1.msra.mxu0 %v786
        %788 = vmatprep.subr.mxu0 0.0
        %v789 = vand.u32 %v177, 4294901760
        %790 = vmatpush1.msra.mxu0 %v789
        %791 = vmatprep.subr.mxu0 0.0
        %v792 = vand.u32 %v178, 4294901760
        %793 = vmatpush1.msra.mxu0 %v792
        %794 = vmatprep.subr.mxu0 0.0
        %v795 = vand.u32 %v179, 4294901760
        %796 = vmatpush1.msra.mxu0 %v795
        %797 = vmatprep.subr.mxu0 0.0
        %v798 = vand.u32 %v180, 4294901760
        %799 = vmatpush1.msra.mxu0 %v798
        %800 = vmatprep.subr.mxu0 0.0
        %v801 = vand.u32 %v181, 4294901760
        %802 = vmatpush1.msra.mxu0 %v801
        %803 = vmatprep.subr.mxu0 0.0
        %v804 = vand.u32 %v182, 4294901760
        %805 = vmatpush1.msra.mxu0 %v804
        %806 = vmatprep.subr.mxu0 0.0
        %v807 = vand.u32 %v183, 4294901760
        %808 = vmatpush1.msra.mxu0 %v807
        %809 = vmatprep.subr.mxu0 0.0
        %v810 = vand.u32 %v184, 4294901760
        %811 = vmatpush1.msra.mxu0 %v810
        %812 = vmatprep.subr.mxu0 0.0
        %v813 = vand.u32 %v185, 4294901760
        %814 = vmatpush1.msra.mxu0 %v813
        %815 = vmatprep.subr.mxu0 0.0
        %v816 = vand.u32 %v186, 4294901760
        %817 = vmatpush1.msra.mxu0 %v816
        %818 = vmatprep.subr.mxu0 0.0
        %v819 = vand.u32 %v187, 4294901760
        %820 = vmatpush1.msra.mxu0 %v819
        %821 = vmatprep.subr.mxu0 0.0
        %v822 = vand.u32 %v188, 4294901760
        %823 = vmatpush1.msra.mxu0 %v822
        %824 = vmatprep.subr.mxu0 0.0
        %v825 = vand.u32 %v189, 4294901760
        %826 = vmatpush1.msra.mxu0 %v825
        %827 = vmatprep.subr.mxu0 0.0
        %v828 = vand.u32 %v190, 4294901760
        %829 = vmatpush1.msra.mxu0 %v828
        %830 = vmatprep.subr.mxu0 0.0
        %v831 = vand.u32 %v191, 4294901760
        %832 = vmatpush1.msra.mxu0 %v831
        %833 = vmatprep.subr.mxu0 0.0
        %834 = vmatpush1.msra.mxu0 0.0
        %835 = vmatprep.subr.mxu0 0.0
        %836 = vmatpush1.msra.mxu0 0.0
        %837 = vmatprep.subr.mxu0 0.0
        %838 = vmatpush1.msra.mxu0 0.0
        %839 = vmatprep.subr.mxu0 0.0
        %840 = vmatpush1.msra.mxu0 0.0
        %841 = vmatprep.subr.mxu0 0.0
        %842 = vmatpush1.msra.mxu0 0.0
        %843 = vmatprep.subr.mxu0 0.0
        %844 = vmatpush1.msra.mxu0 0.0
        %845 = vmatprep.subr.mxu0 0.0
        %846 = vmatpush1.msra.mxu0 0.0
        %847 = vmatprep.subr.mxu0 0.0
        %848 = vmatpush1.msra.mxu0 0.0
        %849 = vmatprep.subr.mxu0 0.0
        %850 = vmatpush1.msra.mxu0 0.0
        %851 = vmatprep.subr.mxu0 0.0
        %852 = vmatpush1.msra.mxu0 0.0
        %853 = vmatprep.subr.mxu0 0.0
        %854 = vmatpush1.msra.mxu0 0.0
        %855 = vmatprep.subr.mxu0 0.0
        %856 = vmatpush1.msra.mxu0 0.0
        %857 = vmatprep.subr.mxu0 0.0
        %858 = vmatpush1.msra.mxu0 0.0
        %859 = vmatprep.subr.mxu0 0.0
        %860 = vmatpush1.msra.mxu0 0.0
        %861 = vmatprep.subr.mxu0 0.0
        %862 = vmatpush1.msra.mxu0 0.0
        %863 = vmatprep.subr.mxu0 0.0
        %864 = vmatpush1.msra.mxu0 0.0
        %865 = vmatprep.mubr.f32.mxu0 0.0
        %v866 = vand.u32 %v192, 4294901760
        %867 = vmatmul.mubr.f32.gmra.mrb[0].mxu0 %v866
        %v868 = vpop.f32.mrb[0].mxu0
        %v869 = vadd.f32 %v776, %v868
        %v870 = vpop.f32.mrb[0].mxu0
        %871 = vmatprep.mubr.f32.mxu0 0.0
        %v872 = vand.u32 %v193, 4294901760
        %873 = vmatmul.mubr.f32.gmra.mrb[0].mxu0 %v872
        %v874 = vpop.f32.mrb[0].mxu0
        %v875 = vadd.f32 %v782, %v874
        %v876 = vpop.f32.mrb[0].mxu0
        %877 = vdwg.mxu0
        %v878 = vfloor.f32 %v869
        %v879 = vfloor.f32 %v875
        %v880 = vsub.f32 %v869, %v878
        %v881 = vsub.f32 %v875, %v879
        %v882 = vmul.f32 %v880, 6.2831855
        %v883 = vmul.f32 %v881, 6.2831855
        %v884 = vand.u32 2147483647, %v882
        %vm885 = vcmp.le.f32.partialorder %v884, 0.7853982
        %vm886 = vcmp.lt.s32.totalorder %v882, 0
        %v887 = vand.u32 %v882, 2139095040
        %v888 = vshrl.u32 %v887, 23
        %v889 = vsub.s32 %v888, 127
        %v890 = vand.u32 2147483647, %v882
        %v891 = vand.u32 %v890, 8388607
        %v892 = vor.u32 %v891, 8388608
        %v893 = vsub.s32 0, %v892
        %v894 = vadd.s32 %v889, 1
        %vm895 = vcmp.gt.s32.totalorder %v894, 0
        %v896 = vsel %vm895, %v894, 0
        %v897 = vshrl.u32 %v896, 5
        %v898 = vand.u32 %v896, 31
        %v899 = vsub.s32 32, %v898
        %v900 = vshrl.u32 683565275, %v899
        %v901 = vshll.u32 683565275, %v898
        %v902 = vshrl.u32 2475754826, %v899
        %v903 = vor.u32 %v901, %v902
        %v904 = vshll.u32 2475754826, %v898
        %v905 = vshrl.u32 2131351028, %v899
        %v906 = vor.u32 %v904, %v905
        %v907 = vshll.u32 2131351028, %v898
        %v908 = vshrl.u32 2102212464, %v899
        %v909 = vor.u32 %v907, %v908
        %v910 = vshll.u32 2102212464, %v898
        %v911 = vshrl.u32 920167782, %v899
        %v912 = vor.u32 %v910, %v911
        %v913 = vshll.u32 920167782, %v898
        %v914 = vshrl.u32 1326507024, %v899
        %v915 = vor.u32 %v913, %v914
        %vm916 = vcmp.lt.s32.totalorder %v897, 1
        %vm917 = vcmp.lt.s32.totalorder %v897, 2
        %vm918 = vcmp.lt.s32.totalorder %v897, 3
        %vm919 = vcmp.lt.s32.totalorder %v897, 4
        %v920 = vsel %vm916, %v900, %v903
        %v921 = vsel %vm919, %v909, 2102212464
        %v922 = vsel %vm918, %v906, %v921
        %v923 = vsel %vm917, %v920, %v922
        %v924 = vsel %vm916, %v903, %v906
        %v925 = vsel %vm919, %v912, 920167782
        %v926 = vsel %vm918, %v909, %v925
        %v927 = vsel %vm917, %v924, %v926
        %v928 = vsel %vm916, %v906, %v909
        %v929 = vsel %vm919, %v915, 1326507024
        %v930 = vsel %vm918, %v912, %v929
        %v931 = vsel %vm917, %v928, %v930
        %v932 = vshll.u32 %v892, 8
        %v933 = vmul.u32.u64.compose %v932, %v931
        %v934 = vextract.low.u32 %v933
        %v935 = vextract.high.u32 %v933
        %v936 = vmul.u32.u64.compose %v932, %v927
        %v937 = vextract.low.u32 %v936
        %v938 = vextract.high.u32 %v936
        %v939 = vmul.u32 %v932, %v923
        %v940 = vadd.s32 %v935, %v937
        %vm941 = vc.u32 %v935, %v937
        %v942 = vadd.s32 %v938, 1
        %v943 = vsel %vm941, %v942, %v938
        %v944 = vadd.s32 %v939, %v943
        %v945 = vadd.s32 %v944, 536870912
        %v946 = vshrl.u32 %v945, 30
        %v947 = vshll.u32 %v946, 30
        %v948 = vsub.s32 %v944, %v947
        %vm949 = vcmp.lt.s32.totalorder %v948, 0
        %v950 = vsub.s32 0, %v948
        %v951 = vsel %vm949, %v950, %v948
        %v952 = vclz %v951
        %v953 = vsub.s32 %v952, 2
        %vm954 = vcmp.gt.s32.totalorder 0, %v953
        %v955 = vsel %vm954, 0, %v953
        %v956 = vsub.s32 32, %v955
        %v957 = vshll.u32 %v948, %v955
        %v958 = vshrl.u32 %v940, %v956
        %v959 = vor.u32 %v957, %v958
        %v960 = vsub.s32 4294967266, %v955
        %v961 = vadd.s32 %v960, 127
        %v962 = vshll.u32 %v961, 23
        %v963 = vor.u32 4788187, %v962
        %v964 = vand.u32 2147483647, %v963
        %v966 = vcvt.s32.f32 %v959
        %v967 = vmul.f32 %v966, %v964
        %v968 = vxor.u32 %v967, 2147483648
        %v969 = vsel %vm886, %v968, %v967
        %v970 = vsub.s32 4, %v946
        %v971 = vsel %vm886, %v970, %v946
        %v972 = vsel %vm885, %v882, %v969
        %v973 = vsel %vm885, 0, %v971
        %v974 = vcosq.f32.pop %v972
        %v975 = vsinq.f32.pop %v972
        %vm976 = vweird.f32 %v882
        %v977 = vadd.s32 %v973, 3
        %v978 = vand.u32 %v977, 3
        %vm979 = vcmp.lt.s32.totalorder %v978, 2
        %vm980 = vcmp.eq.s32.totalorder %v978, 0
        %v981 = vxor.u32 %v975, 2147483648
        %v982 = vsel %vm980, %v974, %v981
        %vm983 = vcmp.eq.s32.totalorder %v978, 2
        %v984 = vxor.u32 %v974, 2147483648
        %v985 = vsel %vm983, %v984, %v975
        %v986 = vsel %vm979, %v982, %v985
        %v987 = vsel %vm976, nan, %v986
        %v988 = vand.u32 2147483647, %v883
        %vm989 = vcmp.le.f32.partialorder %v988, 0.7853982
        %vm990 = vcmp.lt.s32.totalorder %v883, 0
        %v991 = vand.u32 %v883, 2139095040
        %v992 = vshrl.u32 %v991, 23
        %v993 = vsub.s32 %v992, 127
        %v994 = vand.u32 2147483647, %v883
        %v995 = vand.u32 %v994, 8388607
        %v996 = vor.u32 %v995, 8388608
        %v997 = vsub.s32 0, %v996
        %v998 = vadd.s32 %v993, 1
        %vm999 = vcmp.gt.s32.totalorder %v998, 0
        %v1000 = vsel %vm999, %v998, 0
        %v1001 = vshrl.u32 %v1000, 5
        %v1002 = vand.u32 %v1000, 31
        %v1003 = vsub.s32 32, %v1002
        %v1004 = vshrl.u32 683565275, %v1003
        %v1005 = vshll.u32 683565275, %v1002
        %v1006 = vshrl.u32 2475754826, %v1003
        %v1007 = vor.u32 %v1005, %v1006
        %v1008 = vshll.u32 2475754826, %v1002
        %v1009 = vshrl.u32 2131351028, %v1003
        %v1010 = vor.u32 %v1008, %v1009
        %v1011 = vshll.u32 2131351028, %v1002
        %v1012 = vshrl.u32 2102212464, %v1003
        %v1013 = vor.u32 %v1011, %v1012
        %v1014 = vshll.u32 2102212464, %v1002
        %v1015 = vshrl.u32 920167782, %v1003
        %v1016 = vor.u32 %v1014, %v1015
        %v1017 = vshll.u32 920167782, %v1002
        %v1018 = vshrl.u32 1326507024, %v1003
        %v1019 = vor.u32 %v1017, %v1018
        %vm1020 = vcmp.lt.s32.totalorder %v1001, 1
        %vm1021 = vcmp.lt.s32.totalorder %v1001, 2
        %vm1022 = vcmp.lt.s32.totalorder %v1001, 3
        %vm1023 = vcmp.lt.s32.totalorder %v1001, 4
        %v1024 = vsel %vm1020, %v1004, %v1007
        %v1025 = vsel %vm1023, %v1013, 2102212464
        %v1026 = vsel %vm1022, %v1010, %v1025
        %v1027 = vsel %vm1021, %v1024, %v1026
        %v1028 = vsel %vm1020, %v1007, %v1010
        %v1029 = vsel %vm1023, %v1016, 920167782
        %v1030 = vsel %vm1022, %v1013, %v1029
        %v1031 = vsel %vm1021, %v1028, %v1030
        %v1032 = vsel %vm1020, %v1010, %v1013
        %v1033 = vsel %vm1023, %v1019, 1326507024
        %v1034 = vsel %vm1022, %v1016, %v1033
        %v1035 = vsel %vm1021, %v1032, %v1034
        %v1036 = vshll.u32 %v996, 8
        %v1037 = vmul.u32.u64.compose %v1036, %v1035
        %v1038 = vextract.low.u32 %v1037
        %v1039 = vextract.high.u32 %v1037
        %v1040 = vmul.u32.u64.compose %v1036, %v1031
        %v1041 = vextract.low.u32 %v1040
        %v1042 = vextract.high.u32 %v1040
        %v1043 = vmul.u32 %v1036, %v1027
        %v1044 = vadd.s32 %v1039, %v1041
        %vm1045 = vc.u32 %v1039, %v1041
        %v1046 = vadd.s32 %v1042, 1
        %v1047 = vsel %vm1045, %v1046, %v1042
        %v1048 = vadd.s32 %v1043, %v1047
        %v1049 = vadd.s32 %v1048, 536870912
        %v1050 = vshrl.u32 %v1049, 30
        %v1051 = vshll.u32 %v1050, 30
        %v1052 = vsub.s32 %v1048, %v1051
        %vm1053 = vcmp.lt.s32.totalorder %v1052, 0
        %v1054 = vsub.s32 0, %v1052
        %v1055 = vsel %vm1053, %v1054, %v1052
        %v1056 = vclz %v1055
        %v1057 = vsub.s32 %v1056, 2
        %vm1058 = vcmp.gt.s32.totalorder 0, %v1057
        %v1059 = vsel %vm1058, 0, %v1057
        %v1060 = vsub.s32 32, %v1059
        %v1061 = vshll.u32 %v1052, %v1059
        %v1062 = vshrl.u32 %v1044, %v1060
        %v1063 = vor.u32 %v1061, %v1062
        %v1064 = vsub.s32 4294967266, %v1059
        %v1065 = vadd.s32 %v1064, 127
        %v1066 = vshll.u32 %v1065, 23
        %v1067 = vor.u32 4788187, %v1066
        %v1068 = vand.u32 2147483647, %v1067
        %v1070 = vcvt.s32.f32 %v1063
        %v1071 = vmul.f32 %v1070, %v1068
        %v1072 = vxor.u32 %v1071, 2147483648
        %v1073 = vsel %vm990, %v1072, %v1071
        %v1074 = vsub.s32 4, %v1050
        %v1075 = vsel %vm990, %v1074, %v1050
        %v1076 = vsel %vm989, %v883, %v1073
        %v1077 = vsel %vm989, 0, %v1075
        %v1078 = vcosq.f32.pop %v1076
        %v1079 = vsinq.f32.pop %v1076
        %vm1080 = vweird.f32 %v883
        %v1081 = vadd.s32 %v1077, 3
        %v1082 = vand.u32 %v1081, 3
        %vm1083 = vcmp.lt.s32.totalorder %v1082, 2
        %vm1084 = vcmp.eq.s32.totalorder %v1082, 0
        %v1085 = vxor.u32 %v1079, 2147483648
        %v1086 = vsel %vm1084, %v1078, %v1085
        %vm1087 = vcmp.eq.s32.totalorder %v1082, 2
        %v1088 = vxor.u32 %v1078, 2147483648
        %v1089 = vsel %vm1087, %v1088, %v1079
        %v1090 = vsel %vm1083, %v1086, %v1089
        %v1091 = vsel %vm1080, nan, %v1090
        %v1092 = vmul.f32 %v987, 0.1
        %v1093 = vmul.f32 %v1091, 0.1
        %1094 = vst [vmem:[%s175] sm:$0xff] %v1092
        %1095 = vst [vmem:[%s175 + $0x8] sm:$0xff] %v1093
        %s1096 = sand.u32 %s75, 1
        %s1097 = scalar_lea.sflag [#allocation4], %s1096
        %s1098 = sand.u32 %s75, 1
        %s1099 = smul.addr %s1098, 16
        %s1100 = scalar_lea.vmem [#allocation7], %s1099
        // Predicated region
        $region37: #{tpu_custom_call.1} parent=27 // pred_check
          %p1101 = pneg %p85
        $region38: #{tpu_custom_call.1} parent=27 // pred_check_branch
          %1103 = sbr.rel (%p1101) target = $region40
        $region39: #{tpu_custom_call.1} parent=27 // pred_region
          %s1105 = ssub.s32 256, 256
          %1106 = vsyncadd %s1097, %s1105
          %s1107 = smul.addr %s20, 128
          %s1108 = scalar_lea.hbm %s2, %s1107
          %s1109 = sshll.u32 %s1100, 4
          %s1110 = int_to_ptr.vmem [resolvable:$true] %s1109
          %1115 = dma.vmem_to_hbm [thread:$0]  %s1110, 256, %s1108, %s1097, 128, 256, 8
        $region40: #{tpu_custom_call.1} parent=27 // pred_fallthru
          _
      $region28: #{tpu_custom_call.1} parent=5 // pred_fallthru
        _
      %p1116 = scmp.le.s32.totalorder 2, %s15
      // Predicated region
      $region41: #{tpu_custom_call.1} parent=5 // pred_check
        %p1117 = pneg %p1116
      $region42: #{tpu_custom_call.1} parent=5 // pred_check_branch
        %1119 = sbr.rel (%p1117) target = $region44
      $region43: #{tpu_custom_call.1} parent=5 // pred_region
        %s1120 = ssub.s32 %s15, 2
        // Predicated region
        $region45: #{tpu_custom_call.1} parent=43 // pred_check
          %p1121 = pneg %p91
        $region46: #{tpu_custom_call.1} parent=43 // pred_check_branch
          %1123 = sbr.rel (%p1121) target = $region48
        $region47: #{tpu_custom_call.1} parent=43 // pred_region
          %s1124 = sand.u32 %s76, 1
          %s1125 = scalar_lea.sflag [#allocation4], %s1124
          %s1126 = sand.u32 %s76, 1
          %s1127 = smul.addr %s1126, 16
          %s1128 = scalar_lea.vmem [#allocation7], %s1127
          %1129 = dma.done %s1125, 256
        $region48: #{tpu_custom_call.1} parent=43 // pred_fallthru
          _
      $region44: #{tpu_custom_call.1} parent=5 // pred_fallthru
        _
    $region6: #{tpu_custom_call.1} parent=1 // loop_footer
      %s19 = sadd.s32 1, %s15
    $region7: #{tpu_custom_call.1} parent=1 // loop_footer_branch
      %14 = sbr.rel target = $region3
    $region8: #{tpu_custom_call.1} parent=1 // loop_exit
      _
    %1130 = vsyncpa [#allocation3], 1
    %s1131 = scalar_lea.sflag [#allocation3], 1
    %1132 = vsyncpa %s1131, 1
    %1133 = vsyncpa [#allocation6], 1
    %1134 = vsyncpa [#allocation4], 1
    %s1135 = scalar_lea.sflag [#allocation4], 1
    %1136 = vsyncpa %s1135, 1

</llo_original>
